<compile_context>
chip_gen: v7x
topology: tpu7x:2x2x1
jax: 0.10.0
libtpu: 0.0.40
codegen_flags: <defaults>
</compile_context>

<pallas_src>
import jax
import jax.numpy as jnp
from jax.experimental import pallas as pl
from jax.experimental.pallas import tpu as pltpu

LANE = 128
_MAX_C = 4096
_TARGET_BLOCK_BYTES = 4 << 20      # ~4 MiB per block buffer
_MIN_PALLAS_BYTES = 256 * 1024     # below this, fixed pallas_call overhead dominates


def _make_mul_kernel(weight):
    """Elementwise-scale kernel with the scalar weight baked in as a constant."""
    w = float(weight)

    def kernel(x_ref, o_ref):
        # Native-dtype multiply: the python-float scalar is weakly typed, so
        # bf16/f16 inputs stay in bf16 on the VALU (v6e/v7x) with no upcast.
        o_ref[...] = (x_ref[...] * w).astype(o_ref.dtype)

    return kernel


def mul_forward(x: jax.Array, weight: float, *,
                min_pallas_bytes: int = _MIN_PALLAS_BYTES) -> jax.Array:
    """Elementwise x * weight via a tiled, pipelined Pallas streaming kernel."""
    orig_shape = x.shape
    dtype = x.dtype
    n = x.size
    if n == 0:
        return x

    if not jnp.issubdtype(dtype, jnp.floating):
        # PyTorch promotes int_tensor * float_scalar to a float result; let
        # XLA handle that promotion rather than silently truncating the scale.
        return x * weight

    itemsize = jnp.dtype(dtype).itemsize
    total_bytes = n * itemsize

    # Tiny tensors: pallas_call overhead dominates and a standalone custom call
    # blocks XLA fusion with neighbors -> just emit the fused multiply.
    # TODO(synk): fuse this scale into the adjacent producer/consumer kernel.
    if total_bytes < min_pallas_bytes:
        return x * weight

    # ---- lane-dense slab width: largest multiple of 128 (<=4096) dividing n ----
    c = 0
    cand = LANE
    while cand <= _MAX_C:
        if n % cand == 0:
            c = cand
        cand += LANE
    if c == 0:
        # Element count not a multiple of 128: pad+slice would roughly triple
        # HBM traffic for a handful of tail elements -> plain XLA elementwise.
        return x * weight

    rows = n // c
    x2d = x.reshape(rows, c)

    # ---- block rows: ~4 MiB per buffer, aligned to the packed-sublane count ----
    sub = {4: 8, 2: 16, 1: 32}.get(itemsize, 8)
    br = max(1, _TARGET_BLOCK_BYTES // (c * itemsize))
    br = max(sub, (br // sub) * sub)
    if br >= rows:
        # Prefer >= 2 blocks so the "parallel" axis can be split across both
        # TensorCores on v7x (single-block grids leave one TC idle).
        half = ((rows // 2) // sub) * sub
        br = half if half >= sub else rows   # br == rows (full dim) is valid

    grid = (pl.cdiv(rows, br),)

    block_bytes = br * c * itemsize
    # in + out arrays, double-buffered, plus headroom.  Stays <= 32 MiB so it
    # fits v7x's 64 MiB physical VMEM and raises v5e's 16 MiB scoped default.
    vmem_limit = min(32 << 20, max(16 << 20, 4 * block_bytes + (4 << 20)))

    out2d = pl.pallas_call(
        _make_mul_kernel(weight),
        out_shape=jax.ShapeDtypeStruct((rows, c), dtype),
        grid=grid,
        in_specs=[pl.BlockSpec((br, c), lambda i: (i, 0))],
        out_specs=pl.BlockSpec((br, c), lambda i: (i, 0)),
        compiler_params=pltpu.CompilerParams(
            dimension_semantics=("parallel",),
            vmem_limit_bytes=vmem_limit,
        ),
    )(x2d)

    return out2d.reshape(orig_shape)


if __name__ == "__main__":
    weight = 0.125  # the usual CIFAR ResNet9 Mul scale

    # Primary check: small NCHW feature map, forced through the Pallas kernel.
    x = jax.random.normal(jax.random.PRNGKey(0), (2, 4, 16, 16), dtype=jnp.float32)
    out = jax.block_until_ready(mul_forward(x, weight, min_pallas_bytes=0))
    ref = x * weight
    assert out.shape == x.shape and out.dtype == x.dtype
    assert jnp.allclose(out, ref, atol=1e-6, rtol=1e-6)

    # Same small shape with the default threshold exercises the XLA fallback.
    out_fb = jax.block_until_ready(mul_forward(x, weight))
    assert jnp.allclose(out_fb, ref, atol=1e-6, rtol=1e-6)

    # Larger tensor: multi-block (>=2) pipelined streaming path.
    x2 = jax.random.normal(jax.random.PRNGKey(1), (8, 64, 32, 32), dtype=jnp.float32)
    out2 = jax.block_until_ready(mul_forward(x2, weight))
    assert jnp.allclose(out2, x2 * weight, atol=1e-6, rtol=1e-6)

    # bf16: native-dtype multiply path (no f32 upcast; 0.125 is exact in bf16).
    x3 = jax.random.normal(jax.random.PRNGKey(2), (4, 128, 32, 32), dtype=jnp.bfloat16)
    out3 = jax.block_until_ready(mul_forward(x3, weight))
    assert out3.dtype == jnp.bfloat16
    assert jnp.allclose(out3.astype(jnp.float32),
                        x3.astype(jnp.float32) * weight, atol=1e-2, rtol=1e-2)

    print("KERNEL_OK")
</pallas_src>

<mosaic_0001>
module attributes {stable_mosaic.version = 11 : i64} {
  func.func @kernel(%arg0: i32, %arg1: memref<1x2048xf32, #tpu.memory_space<vmem>>, %arg2: memref<1x2048xf32, #tpu.memory_space<vmem>>) attributes {dimension_semantics = [#tpu.dimension_semantics<parallel>], iteration_bounds = array<i64: 1>, scalar_prefetch = 0 : i64, scratch_operands = 0 : i64, tpu.core_type = #tpu.core_type<tc>, window_params = [{transform_indices = @transform_0, window_bounds = array<i64: 1, 2048>}, {transform_indices = @transform_1, window_bounds = array<i64: 1, 2048>}]} {
    %c0 = arith.constant 0 : index
    %c0_0 = arith.constant 0 : index
    %0 = vector.load %arg1[%c0, %c0_0] : memref<1x2048xf32, #tpu.memory_space<vmem>>, vector<1x2048xf32>
    %cst = arith.constant 1.250000e-01 : f32
    %1 = vector.broadcast %cst : f32 to vector<1x2048xf32>
    %2 = arith.mulf %0, %1 : vector<1x2048xf32>
    %c0_1 = arith.constant 0 : index
    %c0_2 = arith.constant 0 : index
    %3 = vector.load %arg2[%c0_1, %c0_2] : memref<1x2048xf32, #tpu.memory_space<vmem>>, vector<1x2048xf32>
    tpu.vector_store %arg2[%c0_1, %c0_2], %2 {strides = array<i32>} : memref<1x2048xf32, #tpu.memory_space<vmem>>, vector<1x2048xf32>,
    return
  }
  func.func @transform_0(%arg0: i32) -> (i32, i32) {
    %c0_i32 = arith.constant 0 : i32
    %c0_i32_0 = arith.constant 0 : i32
    return %arg0, %c0_i32 : i32, i32
  }
  func.func @transform_1(%arg0: i32) -> (i32, i32) {
    %c0_i32 = arith.constant 0 : i32
    %c0_i32_0 = arith.constant 0 : i32
    return %arg0, %c0_i32 : i32, i32
  }
}

</mosaic_0001>

<llo_original>
// kernel: tpu_custom_call.1
$region0: #{tpu_custom_call.1}
  #allocation0 [shape = 'u32[]', space=smem, size = 0x4, offset = 0x4, fixed_abs, tag = 'smem constant byte address 0x4 - core index']
  #allocation1 [shape = 'u32[144,128]{1,0:T(1,128)}', space=vmem, size = 0x12000, scoped, tag = 'internal scratch']
  %s0 = inlined_call_operand.hbm [shape: f32[1,2048], index: 0, kind: input, shape index: {}]
  %s1 = inlined_call_operand.hbm [shape: f32[1,2048], index: 1, kind: output, shape index: {}]
  %s2 = sld [smem:[#allocation0]]
  $region18: #{tpu_custom_call.1} parent=0
    _
  %s4 = ssub.s32 1, %s2
  %s5 = scalar_select 0, %s4, %s2
  $region1: #{tpu_custom_call.1} parent=0
    #allocation2 [shape = 'u8[8192]{0}', space=vmem, size = 0x2000, scoped, tag = 'input window, operand 0, single buffered']
    #allocation3 [shape = 's32[1]{0}', space=sflag, size = 0x4, scoped, tag = 'scoped memory for tpu_custom_call.1']
    #allocation4 [shape = 's32[1]{0}', space=sflag, size = 0x4, scoped, tag = 'scoped memory for tpu_custom_call.1']
    #allocation5 [shape = 'u8[8192]{0}', space=vmem, size = 0x2000, scoped, tag = 'output window, operand 0, single buffered']
    %6 = vsyncpa [#allocation3], 0
    %7 = vsyncpa [#allocation4], 0
    // Predicated region
    $region2: #{tpu_custom_call.1} parent=1 // pred_check
      _
    $region3: #{tpu_custom_call.1} parent=1 // pred_check_branch
      %9 = sbr.rel (0) target = $region5
    $region4: #{tpu_custom_call.1} parent=1 // pred_region
      %s11 = ssub.s32 256, 256
      %12 = vsyncadd [#allocation3], %s11
      %s14 = sshll.u32 [#allocation2], 4
      %s15 = int_to_ptr.vmem [resolvable:$true] %s14
      %17 = dma.hbm_to_vmem [thread:$0]  %s0, 256, %s15, [#allocation3]
    $region5: #{tpu_custom_call.1} parent=1 // pred_fallthru
      _
    // Predicated region
    $region6: #{tpu_custom_call.1} parent=1 // pred_check
      _
    $region7: #{tpu_custom_call.1} parent=1 // pred_check_branch
      %19 = sbr.rel (0) target = $region9
    $region8: #{tpu_custom_call.1} parent=1 // pred_region
      %20 = dma.done [#allocation3], 256
    $region9: #{tpu_custom_call.1} parent=1 // pred_fallthru
      _
    %v21 = vld [vmem:[#allocation2] sm:$0xff]
    %v22 = vld [vmem:[#allocation2 + $0x8] sm:$0xff]
    %v23 = vmul.f32 %v21, 0.125
    %v24 = vmul.f32 %v22, 0.125
    %25 = vst [vmem:[#allocation5] sm:$0xff] %v23
    %26 = vst [vmem:[#allocation5 + $0x8] sm:$0xff] %v24
    // Predicated region
    $region10: #{tpu_custom_call.1} parent=1 // pred_check
      _
    $region11: #{tpu_custom_call.1} parent=1 // pred_check_branch
      %28 = sbr.rel (0) target = $region13
    $region12: #{tpu_custom_call.1} parent=1 // pred_region
      %s30 = ssub.s32 256, 256
      %31 = vsyncadd [#allocation4], %s30
      %s33 = sshll.u32 [#allocation5], 4
      %s34 = int_to_ptr.vmem [resolvable:$true] %s33
      %36 = dma.vmem_to_hbm [thread:$0]  %s34, 256, %s1, [#allocation4]
    $region13: #{tpu_custom_call.1} parent=1 // pred_fallthru
      _
    // Predicated region
    $region14: #{tpu_custom_call.1} parent=1 // pred_check
      _
    $region15: #{tpu_custom_call.1} parent=1 // pred_check_branch
      %38 = sbr.rel (0) target = $region17
    $region16: #{tpu_custom_call.1} parent=1 // pred_region
      %39 = dma.done [#allocation4], 256
    $region17: #{tpu_custom_call.1} parent=1 // pred_fallthru
      _
    %40 = vsyncpa [#allocation3], 1
    %41 = vsyncpa [#allocation4], 1

</llo_original>
